<compile_context>
chip_gen: v7x
topology: tpu7x:2x2x1
jax: 0.10.0
libtpu: 0.0.40
codegen_flags: <defaults>
</compile_context>

<pallas_src>
import functools
import math

import jax
import jax.numpy as jnp
from jax.experimental import pallas as pl
from jax.experimental.pallas import tpu as pltpu


# ------------------------------- kernels -------------------------------------

def _layernorm_kernel(x_ref, scale_ref, shift_ref, o_ref):
    """Standard path: rows along sublanes, features (emb_dim) along lanes."""
    x = x_ref[...].astype(jnp.float32)                      # (tile_rows, D)
    inv_d = 1.0 / x.shape[-1]
    # Single-pass statistics (one block traversal, no centered copy held
    # across two reductions).  Slightly less stable than two-pass; clamp.
    mean = jnp.sum(x, axis=-1, keepdims=True) * inv_d
    ex2 = jnp.sum(x * x, axis=-1, keepdims=True) * inv_d
    var = jnp.maximum(ex2 - mean * mean, 0.0)                # unbiased=False
    # NOTE: the reference forward does NOT add eps before the sqrt.
    rstd = jax.lax.rsqrt(var)                                # EUP
    out = (x - mean) * rstd * scale_ref[...].astype(jnp.float32) \
        + shift_ref[...].astype(jnp.float32)
    o_ref[...] = out.astype(o_ref.dtype)


def _layernorm_packed_kernel(inv_d, x_ref, scale_ref, shift_ref,
                             seg_ref, segt_ref, o_ref):
    """Lane-dense path: `pack` logical rows folded into the 128-lane axis.

    Each packed row holds `pack` independent rows of width emb_dim.  Per-row
    statistics become segmented reductions along the lane axis, implemented as
    matmuls with a (128, pack) one-hot indicator on the MXU (effectively free:
    the kernel is HBM-bound and the MXU slot is idle).
    """
    x = x_ref[...].astype(jnp.float32)                       # (tile, 128)
    seg = seg_ref[...]                                       # (128, pack)
    segt = segt_ref[...]                                     # (pack, 128)
    mean = jnp.dot(x, seg, preferred_element_type=jnp.float32) * inv_d
    ex2 = jnp.dot(x * x, seg, preferred_element_type=jnp.float32) * inv_d
    var = jnp.maximum(ex2 - mean * mean, 0.0)                # unbiased=False
    rstd = jax.lax.rsqrt(var)                                # (tile, pack)
    # Broadcast per-segment stats back across each segment's lanes (MXU).
    mean_b = jnp.dot(mean, segt, preferred_element_type=jnp.float32)
    rstd_b = jnp.dot(rstd, segt, preferred_element_type=jnp.float32)
    out = (x - mean_b) * rstd_b * scale_ref[...].astype(jnp.float32) \
        + shift_ref[...].astype(jnp.float32)
    o_ref[...] = out.astype(o_ref.dtype)


# ----------------------------- tiling policy ----------------------------------

def _vmem_capacity_bytes():
    """Generation-aware VMEM capacity (128 MiB v5e/v6e, 64 MiB per TC on v7x)."""
    try:
        cap = int(pltpu.get_tpu_info().vmem_capacity_bytes)
        if cap > 0:
            return cap
    except Exception:
        pass
    return 64 * 1024 * 1024   # conservative fallback (v7x per-TensorCore)


def _choose_tile_rows(rows, width, itemsize, vmem_cap):
    # Sublane-packing-friendly multiple: 8 for 4-byte, 16 for 2-byte dtypes.
    mult = 8 if itemsize >= 4 else (16 if itemsize == 2 else 32)
    rows_ceil = ((rows + mult - 1) // mult) * mult
    # Block sized as a fraction of this generation's VMEM, in *elements*, so
    # bf16 blocks use half the bytes and the f32 temporaries still fit v7x.
    target_elems = max(64 * 1024, vmem_cap // 64)
    tr = max(mult, (target_elems // max(1, width)) // mult * mult)
    tr = min(tr, rows_ceil)
    # Guarantee >= 4 grid steps when rows permit: >= 2 pipelined steps per
    # TensorCore under v7x megacore sharding (keeps double-buffer overlap and
    # the two cores balanced).
    min_steps = 4
    if rows_ceil >= min_steps * mult:
        cap_tr = (rows_ceil // min_steps) // mult * mult
        if cap_tr >= mult:
            tr = min(tr, cap_tr)
    return tr


# -------------------------------- wrapper --------------------------------------

def layer_norm(x, scale, shift, *, tile_rows=None):
    orig_shape = x.shape
    emb_dim = orig_shape[-1]
    rows = math.prod(orig_shape[:-1]) if len(orig_shape) > 1 else 1
    itemsize = jnp.dtype(x.dtype).itemsize
    vmem_cap = _vmem_capacity_bytes()

    # Lane-dense packing when emb_dim divides 128 (otherwise 1 - emb_dim/128 of
    # every lane, every HBM byte of the tile, and every store would be dead).
    pack = 128 // emb_dim if (0 < emb_dim < 128 and 128 % emb_dim == 0) else 1
    packed = pack > 1 and rows % pack == 0 and rows >= pack
    # TODO(synk): emb_dim < 128 that does NOT divide 128 (e.g. 96) still takes
    # the fallback path with partially-dead lanes; a lcm(emb_dim,128) packing
    # would cover it.

    if packed:
        width = pack * emb_dim                               # == 128
        n_rows = rows // pack
        x2 = x.reshape(n_rows, width)                        # contiguous, free
        scale2 = jnp.tile(scale.reshape(1, emb_dim), (1, pack))
        shift2 = jnp.tile(shift.reshape(1, emb_dim), (1, pack))
        seg = jnp.repeat(jnp.eye(pack, dtype=jnp.float32), emb_dim, axis=0)
        segt = seg.T
    else:
        width = emb_dim
        n_rows = rows
        x2 = x.reshape(n_rows, width)
        scale2 = scale.reshape(1, emb_dim)
        shift2 = shift.reshape(1, emb_dim)

    if tile_rows is None:
        tile_rows = _choose_tile_rows(n_rows, width, itemsize, vmem_cap)
    grid = pl.cdiv(n_rows, tile_rows)

    # VMEM budget: double-buffered in+out blocks + f32 temporaries in the body
    # + params/indicators, capped well below this generation's physical VMEM.
    block_bytes = tile_rows * width * itemsize
    f32_block = tile_rows * width * 4
    est = 4 * block_bytes + 3 * f32_block + 16 * width * 4
    hard_cap = vmem_cap * 7 // 10                # headroom for Mosaic scratch
    vmem_limit = int(min(max(est * 5 // 4, 32 * 1024 * 1024), hard_cap))

    # Deeper input pipeline when blocks are small relative to per-step overhead
    # (mainly v7x at 3.2 TB/s) and there are enough steps to exploit it.
    if grid >= 4 and block_bytes <= 2 * 1024 * 1024:
        x_spec = pl.BlockSpec((tile_rows, width), lambda i: (i, 0),
                              pipeline_mode=pl.Buffered(3))
    else:
        x_spec = pl.BlockSpec((tile_rows, width), lambda i: (i, 0))
    param_spec = pl.BlockSpec((1, width), lambda i: (0, 0))
    out_spec = pl.BlockSpec((tile_rows, width), lambda i: (i, 0))

    if packed:
        kernel = functools.partial(_layernorm_packed_kernel, 1.0 / emb_dim)
        in_specs = [x_spec, param_spec, param_spec,
                    pl.BlockSpec((width, pack), lambda i: (0, 0)),
                    pl.BlockSpec((pack, width), lambda i: (0, 0))]
        operands = (x2, scale2, shift2, seg, segt)
    else:
        kernel = _layernorm_kernel
        in_specs = [x_spec, param_spec, param_spec]
        operands = (x2, scale2, shift2)

    out = pl.pallas_call(
        kernel,
        out_shape=jax.ShapeDtypeStruct((n_rows, width), x.dtype),
        grid_spec=pltpu.PrefetchScalarGridSpec(
            num_scalar_prefetch=0,
            grid=(grid,),
            in_specs=in_specs,
            out_specs=out_spec,
        ),
        compiler_params=pltpu.CompilerParams(
            dimension_semantics=("parallel",),
            vmem_limit_bytes=vmem_limit,
        ),
    )(*operands)

    return out.reshape(orig_shape)


# ------------------------------- self-test ------------------------------------

def _reference(x, scale, shift):
    mean = jnp.mean(x, axis=-1, keepdims=True)
    var = jnp.var(x, axis=-1, keepdims=True)     # ddof=0 == unbiased=False
    return scale * ((x - mean) / jnp.sqrt(var)) + shift


if __name__ == "__main__":
    # 1) Small shape consistent with the module: [batch, seq, emb_dim].
    #    emb_dim=32 exercises the lane-dense packed path (pack=4).
    key = jax.random.PRNGKey(0)
    batch, seq, emb_dim = 2, 8, 32
    x = jax.random.normal(key, (batch, seq, emb_dim), dtype=jnp.float32)
    scale = jnp.ones((emb_dim,), dtype=jnp.float32)   # nn.Parameter(torch.ones)
    shift = jnp.zeros((emb_dim,), dtype=jnp.float32)  # nn.Parameter(torch.zeros)

    out = jax.block_until_ready(layer_norm(x, scale, shift))
    ref = _reference(x, scale, shift)
    assert jnp.allclose(out, ref, atol=1e-4, rtol=1e-4), "mismatch (packed path)"

    # 2) emb_dim multiple of 128, rows not a multiple of the tile: exercises the
    #    standard path with a masked partial row-block and non-trivial params.
    k1, k2, k3 = jax.random.split(jax.random.PRNGKey(1), 3)
    x2 = jax.random.normal(k1, (3, 5, 128), dtype=jnp.float32)
    scale2 = jax.random.normal(k2, (128,), dtype=jnp.float32)
    shift2 = jax.random.normal(k3, (128,), dtype=jnp.float32)
    out2 = jax.block_until_ready(layer_norm(x2, scale2, shift2))
    ref2 = _reference(x2, scale2, shift2)
    assert jnp.allclose(out2, ref2, atol=1e-4, rtol=1e-4), "mismatch (partial block)"

    # 3) emb_dim=32 but rows not divisible by pack: exercises the fallback path.
    x3 = jax.random.normal(jax.random.PRNGKey(2), (2, 7, 32), dtype=jnp.float32)
    out3 = jax.block_until_ready(layer_norm(x3, scale, shift))
    ref3 = _reference(x3, scale, shift)
    assert jnp.allclose(out3, ref3, atol=1e-4, rtol=1e-4), "mismatch (fallback path)"

    print("KERNEL_OK")
</pallas_src>

<mosaic_0001>
module attributes {stable_mosaic.version = 11 : i64} {
  func.func @_layernorm_packed_kernel(%arg0: i32, %arg1: memref<8x128xf32, #tpu.memory_space<vmem>>, %arg2: memref<1x128xf32, #tpu.memory_space<vmem>>, %arg3: memref<1x128xf32, #tpu.memory_space<vmem>>, %arg4: memref<128x4xf32, #tpu.memory_space<vmem>>, %arg5: memref<4x128xf32, #tpu.memory_space<vmem>>, %arg6: memref<8x128xf32, #tpu.memory_space<vmem>>) attributes {dimension_semantics = [#tpu.dimension_semantics<parallel>], iteration_bounds = array<i64: 1>, scalar_prefetch = 0 : i64, scratch_operands = 0 : i64, tpu.core_type = #tpu.core_type<tc>, window_params = [{transform_indices = @transform_0, window_bounds = array<i64: 8, 128>}, {pipeline_mode = #tpu.pipeline_mode<synchronous>, transform_indices = @transform_1, window_bounds = array<i64: 1, 128>}, {pipeline_mode = #tpu.pipeline_mode<synchronous>, transform_indices = @transform_2, window_bounds = array<i64: 1, 128>}, {pipeline_mode = #tpu.pipeline_mode<synchronous>, transform_indices = @transform_3, window_bounds = array<i64: 128, 4>}, {pipeline_mode = #tpu.pipeline_mode<synchronous>, transform_indices = @transform_4, window_bounds = array<i64: 4, 128>}, {transform_indices = @transform_5, window_bounds = array<i64: 8, 128>}]} {
    %c0 = arith.constant 0 : index
    %c0_0 = arith.constant 0 : index
    %0 = vector.load %arg1[%c0, %c0_0] : memref<8x128xf32, #tpu.memory_space<vmem>>, vector<8x128xf32>
    %c0_1 = arith.constant 0 : index
    %c0_2 = arith.constant 0 : index
    %1 = vector.load %arg4[%c0_1, %c0_2] : memref<128x4xf32, #tpu.memory_space<vmem>>, vector<128x4xf32>
    %c0_3 = arith.constant 0 : index
    %c0_4 = arith.constant 0 : index
    %2 = vector.load %arg5[%c0_3, %c0_4] : memref<4x128xf32, #tpu.memory_space<vmem>>, vector<4x128xf32>
    %cst = arith.constant dense<0.000000e+00> : vector<8x4xf32>
    %3 = tpu.matmul %0, %1, %cst {dimension_numbers = #tpu.dot_dimension_numbers<[1], [0], [0], [1], [0, 0, 1, 1], [], []>} : vector<8x128xf32>, vector<128x4xf32>, vector<8x4xf32> -> vector<8x4xf32>
    %cst_5 = arith.constant 3.125000e-02 : f32
    %4 = vector.broadcast %cst_5 : f32 to vector<8x4xf32>
    %5 = arith.mulf %3, %4 : vector<8x4xf32>
    %6 = arith.mulf %0, %0 : vector<8x128xf32>
    %cst_6 = arith.constant dense<0.000000e+00> : vector<8x4xf32>
    %7 = tpu.matmul %6, %1, %cst_6 {dimension_numbers = #tpu.dot_dimension_numbers<[1], [0], [0], [1], [0, 0, 1, 1], [], []>} : vector<8x128xf32>, vector<128x4xf32>, vector<8x4xf32> -> vector<8x4xf32>
    %cst_7 = arith.constant 3.125000e-02 : f32
    %8 = vector.broadcast %cst_7 : f32 to vector<8x4xf32>
    %9 = arith.mulf %7, %8 : vector<8x4xf32>
    %10 = arith.mulf %5, %5 : vector<8x4xf32>
    %11 = arith.subf %9, %10 : vector<8x4xf32>
    %cst_8 = arith.constant 0.000000e+00 : f32
    %12 = vector.broadcast %cst_8 : f32 to vector<8x4xf32>
    %13 = arith.maximumf %11, %12 : vector<8x4xf32>
    %14 = math.rsqrt %13 : vector<8x4xf32>
    %cst_9 = arith.constant dense<0.000000e+00> : vector<8x128xf32>
    %15 = tpu.matmul %5, %2, %cst_9 {dimension_numbers = #tpu.dot_dimension_numbers<[1], [0], [0], [1], [0, 0, 1, 1], [], []>} : vector<8x4xf32>, vector<4x128xf32>, vector<8x128xf32> -> vector<8x128xf32>
    %cst_10 = arith.constant dense<0.000000e+00> : vector<8x128xf32>
    %16 = tpu.matmul %14, %2, %cst_10 {dimension_numbers = #tpu.dot_dimension_numbers<[1], [0], [0], [1], [0, 0, 1, 1], [], []>} : vector<8x4xf32>, vector<4x128xf32>, vector<8x128xf32> -> vector<8x128xf32>
    %17 = arith.subf %0, %15 : vector<8x128xf32>
    %18 = arith.mulf %17, %16 : vector<8x128xf32>
    %c0_11 = arith.constant 0 : index
    %c0_12 = arith.constant 0 : index
    %19 = vector.load %arg2[%c0_11, %c0_12] : memref<1x128xf32, #tpu.memory_space<vmem>>, vector<1x128xf32>
    %20 = vector.broadcast %19 : vector<1x128xf32> to vector<8x128xf32>
    %21 = arith.mulf %18, %20 : vector<8x128xf32>
    %c0_13 = arith.constant 0 : index
    %c0_14 = arith.constant 0 : index
    %22 = vector.load %arg3[%c0_13, %c0_14] : memref<1x128xf32, #tpu.memory_space<vmem>>, vector<1x128xf32>
    %23 = vector.broadcast %22 : vector<1x128xf32> to vector<8x128xf32>
    %24 = arith.addf %21, %23 : vector<8x128xf32>
    %c0_15 = arith.constant 0 : index
    %c0_16 = arith.constant 0 : index
    %25 = vector.load %arg6[%c0_15, %c0_16] : memref<8x128xf32, #tpu.memory_space<vmem>>, vector<8x128xf32>
    tpu.vector_store %arg6[%c0_15, %c0_16], %24 {strides = array<i32>} : memref<8x128xf32, #tpu.memory_space<vmem>>, vector<8x128xf32>,
    return
  }
  func.func @transform_0(%arg0: i32) -> (i32, i32) {
    %c0_i32 = arith.constant 0 : i32
    %c0_i32_0 = arith.constant 0 : i32
    return %arg0, %c0_i32 : i32, i32
  }
  func.func @transform_1(%arg0: i32) -> (i32, i32) {
    %c0_i32 = arith.constant 0 : i32
    %c0_i32_0 = arith.constant 0 : i32
    %c0_i32_1 = arith.constant 0 : i32
    return %c0_i32, %c0_i32_0 : i32, i32
  }
  func.func @transform_2(%arg0: i32) -> (i32, i32) {
    %c0_i32 = arith.constant 0 : i32
    %c0_i32_0 = arith.constant 0 : i32
    %c0_i32_1 = arith.constant 0 : i32
    return %c0_i32, %c0_i32_0 : i32, i32
  }
  func.func @transform_3(%arg0: i32) -> (i32, i32) {
    %c0_i32 = arith.constant 0 : i32
    %c0_i32_0 = arith.constant 0 : i32
    %c0_i32_1 = arith.constant 0 : i32
    return %c0_i32, %c0_i32_0 : i32, i32
  }
  func.func @transform_4(%arg0: i32) -> (i32, i32) {
    %c0_i32 = arith.constant 0 : i32
    %c0_i32_0 = arith.constant 0 : i32
    %c0_i32_1 = arith.constant 0 : i32
    return %c0_i32, %c0_i32_0 : i32, i32
  }
  func.func @transform_5(%arg0: i32) -> (i32, i32) {
    %c0_i32 = arith.constant 0 : i32
    %c0_i32_0 = arith.constant 0 : i32
    return %arg0, %c0_i32 : i32, i32
  }
}

</mosaic_0001>

<llo_original>
// kernel: tpu_custom_call.1
$region0: #{tpu_custom_call.1}
  #allocation0 [shape = 'u32[]', space=smem, size = 0x4, offset = 0x4, fixed_abs, tag = 'smem constant byte address 0x4 - core index']
  #allocation1 [shape = 'u32[144,128]{1,0:T(1,128)}', space=vmem, size = 0x12000, scoped, tag = 'internal scratch']
  %s0 = inlined_call_operand.vmem [shape: f32[4,128], index: 0, kind: input, shape index: {}]
  %s1 = inlined_call_operand.vmem [shape: f32[1,128], index: 1, kind: input, shape index: {}]
  %s2 = inlined_call_operand.vmem [shape: f32[1,128], index: 2, kind: input, shape index: {}]
  %s3 = inlined_call_operand.vmem [shape: f32[128,4], index: 3, kind: input, shape index: {}]
  %s4 = inlined_call_operand.vmem [shape: f32[4,128], index: 4, kind: input, shape index: {}]
  %s5 = inlined_call_operand.hbm [shape: f32[4,128], index: 5, kind: output, shape index: {}]
  %s6 = sld [smem:[#allocation0]]
  $region30: #{tpu_custom_call.1} parent=0
    _
  %s8 = ssub.s32 1, %s6
  %s9 = scalar_select 0, %s8, %s6
  $region1: #{tpu_custom_call.1} parent=0
    #allocation2 [shape = 'u8[4096]{0}', space=vmem, size = 0x1000, scoped, tag = 'output window, operand 0, single buffered']
    #allocation3 [shape = 's32[1]{0}', space=sflag, size = 0x4, scoped, tag = 'scoped memory for tpu_custom_call.1']
    %10 = vsyncpa [#allocation3], 0
    // Predicated region
    $region2: #{tpu_custom_call.1} parent=1 // pred_check
      _
    $region3: #{tpu_custom_call.1} parent=1 // pred_check_branch
      %12 = sbr.rel (0) target = $region5
    $region4: #{tpu_custom_call.1} parent=1 // pred_region
      _
    $region5: #{tpu_custom_call.1} parent=1 // pred_fallthru
      _
    // Predicated region
    $region6: #{tpu_custom_call.1} parent=1 // pred_check
      _
    $region7: #{tpu_custom_call.1} parent=1 // pred_check_branch
      %14 = sbr.rel (0) target = $region9
    $region8: #{tpu_custom_call.1} parent=1 // pred_region
      _
    $region9: #{tpu_custom_call.1} parent=1 // pred_fallthru
      _
    // Predicated region
    $region10: #{tpu_custom_call.1} parent=1 // pred_check
      _
    $region11: #{tpu_custom_call.1} parent=1 // pred_check_branch
      %16 = sbr.rel (0) target = $region13
    $region12: #{tpu_custom_call.1} parent=1 // pred_region
      _
    $region13: #{tpu_custom_call.1} parent=1 // pred_fallthru
      _
    // Predicated region
    $region14: #{tpu_custom_call.1} parent=1 // pred_check
      _
    $region15: #{tpu_custom_call.1} parent=1 // pred_check_branch
      %18 = sbr.rel (0) target = $region17
    $region16: #{tpu_custom_call.1} parent=1 // pred_region
      _
    $region17: #{tpu_custom_call.1} parent=1 // pred_fallthru
      _
    // Predicated region
    $region18: #{tpu_custom_call.1} parent=1 // pred_check
      _
    $region19: #{tpu_custom_call.1} parent=1 // pred_check_branch
      %20 = sbr.rel (0) target = $region21
    $region20: #{tpu_custom_call.1} parent=1 // pred_region
      _
    $region21: #{tpu_custom_call.1} parent=1 // pred_fallthru
      _
    %v21 = vld [vmem:[%s0] sm:$0xff]
    %v22 = vld [vmem:[%s3] sm:$0xff]
    %v23 = vld [vmem:[%s3 + $0x8] sm:$0xff]
    %v24 = vld [vmem:[%s3 + $0x10] sm:$0xff]
    %v25 = vld [vmem:[%s3 + $0x18] sm:$0xff]
    %v26 = vld [vmem:[%s3 + $0x20] sm:$0xff]
    %v27 = vld [vmem:[%s3 + $0x28] sm:$0xff]
    %v28 = vld [vmem:[%s3 + $0x30] sm:$0xff]
    %v29 = vld [vmem:[%s3 + $0x38] sm:$0xff]
    %v30 = vld [vmem:[%s3 + $0x40] sm:$0xff]
    %v31 = vld [vmem:[%s3 + $0x48] sm:$0xff]
    %v32 = vld [vmem:[%s3 + $0x50] sm:$0xff]
    %v33 = vld [vmem:[%s3 + $0x58] sm:$0xff]
    %v34 = vld [vmem:[%s3 + $0x60] sm:$0xff]
    %v35 = vld [vmem:[%s3 + $0x68] sm:$0xff]
    %v36 = vld [vmem:[%s3 + $0x70] sm:$0xff]
    %v37 = vld [vmem:[%s3 + $0x78] sm:$0xff]
    %v38 = vld [vmem:[%s4] sm:$0xf]
    %39 = vmatprep.subr.mxu0 0.0
    %40 = vmatpush1.msra.mxu0 %v22
    %41 = vmatprep.subr.mxu0 0.0
    %42 = vmatpush1.msra.mxu0 %v23
    %43 = vmatprep.subr.mxu0 0.0
    %44 = vmatpush1.msra.mxu0 %v24
    %45 = vmatprep.subr.mxu0 0.0
    %46 = vmatpush1.msra.mxu0 %v25
    %47 = vmatprep.subr.mxu0 0.0
    %48 = vmatpush1.msra.mxu0 %v26
    %49 = vmatprep.subr.mxu0 0.0
    %50 = vmatpush1.msra.mxu0 %v27
    %51 = vmatprep.subr.mxu0 0.0
    %52 = vmatpush1.msra.mxu0 %v28
    %53 = vmatprep.subr.mxu0 0.0
    %54 = vmatpush1.msra.mxu0 %v29
    %55 = vmatprep.subr.mxu0 0.0
    %56 = vmatpush1.msra.mxu0 %v30
    %57 = vmatprep.subr.mxu0 0.0
    %58 = vmatpush1.msra.mxu0 %v31
    %59 = vmatprep.subr.mxu0 0.0
    %60 = vmatpush1.msra.mxu0 %v32
    %61 = vmatprep.subr.mxu0 0.0
    %62 = vmatpush1.msra.mxu0 %v33
    %63 = vmatprep.subr.mxu0 0.0
    %64 = vmatpush1.msra.mxu0 %v34
    %65 = vmatprep.subr.mxu0 0.0
    %66 = vmatpush1.msra.mxu0 %v35
    %67 = vmatprep.subr.mxu0 0.0
    %68 = vmatpush1.msra.mxu0 %v36
    %69 = vmatprep.subr.mxu0 0.0
    %70 = vmatpush1.msra.mxu0 %v37
    %71 = vmatprep.subr.mxu0 0.0
    %72 = vmatpush1.msra.mxu0 0.0
    %73 = vmatprep.subr.mxu0 0.0
    %74 = vmatpush1.msra.mxu0 0.0
    %75 = vmatprep.subr.mxu0 0.0
    %76 = vmatpush1.msra.mxu0 0.0
    %77 = vmatprep.subr.mxu0 0.0
    %78 = vmatpush1.msra.mxu0 0.0
    %79 = vmatprep.subr.mxu0 0.0
    %80 = vmatpush1.msra.mxu0 0.0
    %81 = vmatprep.subr.mxu0 0.0
    %82 = vmatpush1.msra.mxu0 0.0
    %83 = vmatprep.subr.mxu0 0.0
    %84 = vmatpush1.msra.mxu0 0.0
    %85 = vmatprep.subr.mxu0 0.0
    %86 = vmatpush1.msra.mxu0 0.0
    %87 = vmatprep.subr.mxu0 0.0
    %88 = vmatpush1.msra.mxu0 0.0
    %89 = vmatprep.subr.mxu0 0.0
    %90 = vmatpush1.msra.mxu0 0.0
    %91 = vmatprep.subr.mxu0 0.0
    %92 = vmatpush1.msra.mxu0 0.0
    %93 = vmatprep.subr.mxu0 0.0
    %94 = vmatpush1.msra.mxu0 0.0
    %95 = vmatprep.subr.mxu0 0.0
    %96 = vmatpush1.msra.mxu0 0.0
    %97 = vmatprep.subr.mxu0 0.0
    %98 = vmatpush1.msra.mxu0 0.0
    %99 = vmatprep.subr.mxu0 0.0
    %100 = vmatpush1.msra.mxu0 0.0
    %101 = vmatprep.subr.mxu0 0.0
    %102 = vmatpush1.msra.mxu0 0.0
    %103 = vmatprep.mubr.f32.mxu0 0.0
    %104 = vmatmul.mubr.f32.gmra.mrb[0].mxu0 %v21
    %v105 = vpop.f32.mrb[0].mxu0
    %v106 = vadd.f32 0.0, %v105
    %v107 = vpop.f32.mrb[0].mxu0
    %108 = vdwg.mxu0
    %v109 = vmul.f32 %v106, 0.03125
    %v110 = vmul.f32 %v21, %v21
    %111 = vmatprep.subr.mxu0 0.0
    %112 = vmatpush1.msra.mxu0 %v22
    %113 = vmatprep.subr.mxu0 0.0
    %114 = vmatpush1.msra.mxu0 %v23
    %115 = vmatprep.subr.mxu0 0.0
    %116 = vmatpush1.msra.mxu0 %v24
    %117 = vmatprep.subr.mxu0 0.0
    %118 = vmatpush1.msra.mxu0 %v25
    %119 = vmatprep.subr.mxu0 0.0
    %120 = vmatpush1.msra.mxu0 %v26
    %121 = vmatprep.subr.mxu0 0.0
    %122 = vmatpush1.msra.mxu0 %v27
    %123 = vmatprep.subr.mxu0 0.0
    %124 = vmatpush1.msra.mxu0 %v28
    %125 = vmatprep.subr.mxu0 0.0
    %126 = vmatpush1.msra.mxu0 %v29
    %127 = vmatprep.subr.mxu0 0.0
    %128 = vmatpush1.msra.mxu0 %v30
    %129 = vmatprep.subr.mxu0 0.0
    %130 = vmatpush1.msra.mxu0 %v31
    %131 = vmatprep.subr.mxu0 0.0
    %132 = vmatpush1.msra.mxu0 %v32
    %133 = vmatprep.subr.mxu0 0.0
    %134 = vmatpush1.msra.mxu0 %v33
    %135 = vmatprep.subr.mxu0 0.0
    %136 = vmatpush1.msra.mxu0 %v34
    %137 = vmatprep.subr.mxu0 0.0
    %138 = vmatpush1.msra.mxu0 %v35
    %139 = vmatprep.subr.mxu0 0.0
    %140 = vmatpush1.msra.mxu0 %v36
    %141 = vmatprep.subr.mxu0 0.0
    %142 = vmatpush1.msra.mxu0 %v37
    %143 = vmatprep.subr.mxu0 0.0
    %144 = vmatpush1.msra.mxu0 0.0
    %145 = vmatprep.subr.mxu0 0.0
    %146 = vmatpush1.msra.mxu0 0.0
    %147 = vmatprep.subr.mxu0 0.0
    %148 = vmatpush1.msra.mxu0 0.0
    %149 = vmatprep.subr.mxu0 0.0
    %150 = vmatpush1.msra.mxu0 0.0
    %151 = vmatprep.subr.mxu0 0.0
    %152 = vmatpush1.msra.mxu0 0.0
    %153 = vmatprep.subr.mxu0 0.0
    %154 = vmatpush1.msra.mxu0 0.0
    %155 = vmatprep.subr.mxu0 0.0
    %156 = vmatpush1.msra.mxu0 0.0
    %157 = vmatprep.subr.mxu0 0.0
    %158 = vmatpush1.msra.mxu0 0.0
    %159 = vmatprep.subr.mxu0 0.0
    %160 = vmatpush1.msra.mxu0 0.0
    %161 = vmatprep.subr.mxu0 0.0
    %162 = vmatpush1.msra.mxu0 0.0
    %163 = vmatprep.subr.mxu0 0.0
    %164 = vmatpush1.msra.mxu0 0.0
    %165 = vmatprep.subr.mxu0 0.0
    %166 = vmatpush1.msra.mxu0 0.0
    %167 = vmatprep.subr.mxu0 0.0
    %168 = vmatpush1.msra.mxu0 0.0
    %169 = vmatprep.subr.mxu0 0.0
    %170 = vmatpush1.msra.mxu0 0.0
    %171 = vmatprep.subr.mxu0 0.0
    %172 = vmatpush1.msra.mxu0 0.0
    %173 = vmatprep.subr.mxu0 0.0
    %174 = vmatpush1.msra.mxu0 0.0
    %175 = vmatprep.mubr.f32.mxu0 0.0
    %176 = vmatmul.mubr.f32.gmra.mrb[0].mxu0 %v110
    %v177 = vpop.f32.mrb[0].mxu0
    %v178 = vadd.f32 0.0, %v177
    %v179 = vpop.f32.mrb[0].mxu0
    %180 = vdwg.mxu0
    %v181 = vmul.f32 %v178, 0.03125
    %v182 = vmul.f32 %v109, %v109
    %v183 = vsub.f32 %v181, %v182
    %v184 = vmax.f32 %v183, 0.0
    %v185 = vrsqrt.pop %v184
    %vm186 = vcmask 31744
    %v188 = vsel %vm186, %v109, 0
    %vm190 = vcmask 1043456
    %v192 = vsel %vm190, %v38, 0
    %194 = vmatprep.subr.mxu0 0.0
    %195 = vmatpush1.msra.mxu0 %v192
    %196 = vmatprep.subr.mxu0 0.0
    %197 = vmatpush1.msra.mxu0 0.0
    %198 = vmatprep.subr.mxu0 0.0
    %199 = vmatpush1.msra.mxu0 0.0
    %200 = vmatprep.subr.mxu0 0.0
    %201 = vmatpush1.msra.mxu0 0.0
    %202 = vmatprep.subr.mxu0 0.0
    %203 = vmatpush1.msra.mxu0 0.0
    %204 = vmatprep.subr.mxu0 0.0
    %205 = vmatpush1.msra.mxu0 0.0
    %206 = vmatprep.subr.mxu0 0.0
    %207 = vmatpush1.msra.mxu0 0.0
    %208 = vmatprep.subr.mxu0 0.0
    %209 = vmatpush1.msra.mxu0 0.0
    %210 = vmatprep.subr.mxu0 0.0
    %211 = vmatpush1.msra.mxu0 0.0
    %212 = vmatprep.subr.mxu0 0.0
    %213 = vmatpush1.msra.mxu0 0.0
    %214 = vmatprep.subr.mxu0 0.0
    %215 = vmatpush1.msra.mxu0 0.0
    %216 = vmatprep.subr.mxu0 0.0
    %217 = vmatpush1.msra.mxu0 0.0
    %218 = vmatprep.subr.mxu0 0.0
    %219 = vmatpush1.msra.mxu0 0.0
    %220 = vmatprep.subr.mxu0 0.0
    %221 = vmatpush1.msra.mxu0 0.0
    %222 = vmatprep.subr.mxu0 0.0
    %223 = vmatpush1.msra.mxu0 0.0
    %224 = vmatprep.subr.mxu0 0.0
    %225 = vmatpush1.msra.mxu0 0.0
    %226 = vmatprep.subr.mxu0 0.0
    %227 = vmatpush1.msra.mxu0 0.0
    %228 = vmatprep.subr.mxu0 0.0
    %229 = vmatpush1.msra.mxu0 0.0
    %230 = vmatprep.subr.mxu0 0.0
    %231 = vmatpush1.msra.mxu0 0.0
    %232 = vmatprep.subr.mxu0 0.0
    %233 = vmatpush1.msra.mxu0 0.0
    %234 = vmatprep.subr.mxu0 0.0
    %235 = vmatpush1.msra.mxu0 0.0
    %236 = vmatprep.subr.mxu0 0.0
    %237 = vmatpush1.msra.mxu0 0.0
    %238 = vmatprep.subr.mxu0 0.0
    %239 = vmatpush1.msra.mxu0 0.0
    %240 = vmatprep.subr.mxu0 0.0
    %241 = vmatpush1.msra.mxu0 0.0
    %242 = vmatprep.subr.mxu0 0.0
    %243 = vmatpush1.msra.mxu0 0.0
    %244 = vmatprep.subr.mxu0 0.0
    %245 = vmatpush1.msra.mxu0 0.0
    %246 = vmatprep.subr.mxu0 0.0
    %247 = vmatpush1.msra.mxu0 0.0
    %248 = vmatprep.subr.mxu0 0.0
    %249 = vmatpush1.msra.mxu0 0.0
    %250 = vmatprep.subr.mxu0 0.0
    %251 = vmatpush1.msra.mxu0 0.0
    %252 = vmatprep.subr.mxu0 0.0
    %253 = vmatpush1.msra.mxu0 0.0
    %254 = vmatprep.subr.mxu0 0.0
    %255 = vmatpush1.msra.mxu0 0.0
    %256 = vmatprep.subr.mxu0 0.0
    %257 = vmatpush1.msra.mxu0 0.0
    %258 = vmatprep.mubr.f32.mxu0 0.0
    %259 = vmatmul.mubr.f32.gmra.mrb[0].mxu0 %v188
    %v260 = vpop.f32.mrb[0].mxu0
    %v261 = vadd.f32 0.0, %v260
    %v262 = vpop.f32.mrb[0].mxu0
    %263 = vdwg.mxu0
    %v265 = vsel %vm186, %v185, 0
    %267 = vmatprep.subr.mxu0 0.0
    %268 = vmatpush1.msra.mxu0 %v192
    %269 = vmatprep.subr.mxu0 0.0
    %270 = vmatpush1.msra.mxu0 0.0
    %271 = vmatprep.subr.mxu0 0.0
    %272 = vmatpush1.msra.mxu0 0.0
    %273 = vmatprep.subr.mxu0 0.0
    %274 = vmatpush1.msra.mxu0 0.0
    %275 = vmatprep.subr.mxu0 0.0
    %276 = vmatpush1.msra.mxu0 0.0
    %277 = vmatprep.subr.mxu0 0.0
    %278 = vmatpush1.msra.mxu0 0.0
    %279 = vmatprep.subr.mxu0 0.0
    %280 = vmatpush1.msra.mxu0 0.0
    %281 = vmatprep.subr.mxu0 0.0
    %282 = vmatpush1.msra.mxu0 0.0
    %283 = vmatprep.subr.mxu0 0.0
    %284 = vmatpush1.msra.mxu0 0.0
    %285 = vmatprep.subr.mxu0 0.0
    %286 = vmatpush1.msra.mxu0 0.0
    %287 = vmatprep.subr.mxu0 0.0
    %288 = vmatpush1.msra.mxu0 0.0
    %289 = vmatprep.subr.mxu0 0.0
    %290 = vmatpush1.msra.mxu0 0.0
    %291 = vmatprep.subr.mxu0 0.0
    %292 = vmatpush1.msra.mxu0 0.0
    %293 = vmatprep.subr.mxu0 0.0
    %294 = vmatpush1.msra.mxu0 0.0
    %295 = vmatprep.subr.mxu0 0.0
    %296 = vmatpush1.msra.mxu0 0.0
    %297 = vmatprep.subr.mxu0 0.0
    %298 = vmatpush1.msra.mxu0 0.0
    %299 = vmatprep.subr.mxu0 0.0
    %300 = vmatpush1.msra.mxu0 0.0
    %301 = vmatprep.subr.mxu0 0.0
    %302 = vmatpush1.msra.mxu0 0.0
    %303 = vmatprep.subr.mxu0 0.0
    %304 = vmatpush1.msra.mxu0 0.0
    %305 = vmatprep.subr.mxu0 0.0
    %306 = vmatpush1.msra.mxu0 0.0
    %307 = vmatprep.subr.mxu0 0.0
    %308 = vmatpush1.msra.mxu0 0.0
    %309 = vmatprep.subr.mxu0 0.0
    %310 = vmatpush1.msra.mxu0 0.0
    %311 = vmatprep.subr.mxu0 0.0
    %312 = vmatpush1.msra.mxu0 0.0
    %313 = vmatprep.subr.mxu0 0.0
    %314 = vmatpush1.msra.mxu0 0.0
    %315 = vmatprep.subr.mxu0 0.0
    %316 = vmatpush1.msra.mxu0 0.0
    %317 = vmatprep.subr.mxu0 0.0
    %318 = vmatpush1.msra.mxu0 0.0
    %319 = vmatprep.subr.mxu0 0.0
    %320 = vmatpush1.msra.mxu0 0.0
    %321 = vmatprep.subr.mxu0 0.0
    %322 = vmatpush1.msra.mxu0 0.0
    %323 = vmatprep.subr.mxu0 0.0
    %324 = vmatpush1.msra.mxu0 0.0
    %325 = vmatprep.subr.mxu0 0.0
    %326 = vmatpush1.msra.mxu0 0.0
    %327 = vmatprep.subr.mxu0 0.0
    %328 = vmatpush1.msra.mxu0 0.0
    %329 = vmatprep.subr.mxu0 0.0
    %330 = vmatpush1.msra.mxu0 0.0
    %331 = vmatprep.mubr.f32.mxu0 0.0
    %332 = vmatmul.mubr.f32.gmra.mrb[0].mxu0 %v265
    %v333 = vpop.f32.mrb[0].mxu0
    %v334 = vadd.f32 0.0, %v333
    %v335 = vpop.f32.mrb[0].mxu0
    %336 = vdwg.mxu0
    %v337 = vsub.f32 %v21, %v261
    %v338 = vmul.f32 %v337, %v334
    %v339 = vld [vmem:[%s1] sm:$0x1]
    %v341 = vlaneseq
    %v342 = vshrl.u32 %v341, 7
    %v343 = vsub.s32 0, %v342
    %v344 = vrot.slane %v339, %v343
    %v346 = vmul.f32 %v338, %v344
    %v347 = vld [vmem:[%s2] sm:$0x1]
    %v349 = vlaneseq
    %v350 = vshrl.u32 %v349, 7
    %v351 = vsub.s32 0, %v350
    %v352 = vrot.slane %v347, %v351
    %v354 = vadd.f32 %v346, %v352
    %355 = vst [vmem:[#allocation2] sm:$0xff] %v354
    // Predicated region
    $region22: #{tpu_custom_call.1} parent=1 // pred_check
      _
    $region23: #{tpu_custom_call.1} parent=1 // pred_check_branch
      %357 = sbr.rel (0) target = $region25
    $region24: #{tpu_custom_call.1} parent=1 // pred_region
      %s359 = ssub.s32 128, 64
      %360 = vsyncadd [#allocation3], %s359
      %s361 = sshll.u32 [#allocation2], 4
      %s362 = int_to_ptr.vmem [resolvable:$true] %s361
      %367 = dma.vmem_to_hbm [thread:$0]  %s362, 64, %s5, [#allocation3], 64, 64, 4
    $region25: #{tpu_custom_call.1} parent=1 // pred_fallthru
      _
    // Predicated region
    $region26: #{tpu_custom_call.1} parent=1 // pred_check
      _
    $region27: #{tpu_custom_call.1} parent=1 // pred_check_branch
      %369 = sbr.rel (0) target = $region29
    $region28: #{tpu_custom_call.1} parent=1 // pred_region
      %370 = dma.done [#allocation3], 128
    $region29: #{tpu_custom_call.1} parent=1 // pred_fallthru
      _
    %371 = vsyncpa [#allocation3], 1

</llo_original>
